<compile_context>
chip_gen: v5e
topology: v5e:2x2
jax: 0.10.0
libtpu: 0.0.40
codegen_flags: <defaults>
</compile_context>

<pallas_src>
import functools

import jax
import jax.numpy as jnp
from jax.experimental import pallas as pl
from jax.experimental.pallas import tpu as pltpu


def _round_up(x, m):
    return (x + m - 1) // m * m


def _multi_ce_kernel(logits_ref, targets_ref, out_ref, *, class_labels_num, batch):
    """One batch tile.

    logits_ref : [TB, Csum]  natural layout (batch on sublanes)
    targets_ref: [TB, G]     int32, natural layout
    out_ref    : [1, 1, 128] per-tile sum of CE over samples and groups
                 (broadcast across the 128 lanes for an unmasked store)
    """
    tb = logits_ref.shape[0]

    # In-kernel transpose (XLU) to a lane-dense layout: batch on the 128-lane
    # axis, classes/groups on sublanes.  Replaces the old wrapper-side
    # jnp.transpose + jnp.pad (which cost 1-2 extra full HBM passes).
    xt = jnp.transpose(logits_ref[...])           # [Csum, TB], input dtype
    tt = jnp.transpose(targets_ref[...])          # [G,    TB], int32

    cmax = max(class_labels_num)
    # Hoisted iota (JAX does not CSE broadcast_in_dim); statically sliced per group.
    row_ids = jax.lax.broadcasted_iota(jnp.int32, (cmax, tb), 0)

    acc = jnp.zeros((1, tb), jnp.float32)
    off = 0
    for g, c in enumerate(class_labels_num):          # static unroll over groups
        xg = xt[off:off + c, :].astype(jnp.float32)   # per-group f32 cast, [c, TB]
        tg = tt[g:g + 1, :]                           # [1, TB] int32
        # log-sum-exp over the (tiny) class axis sitting on sublanes
        m = jnp.max(xg, axis=0, keepdims=True)                        # [1, TB]
        lse = jnp.log(jnp.sum(jnp.exp(xg - m), axis=0, keepdims=True))
        # x[target] via VPU one-hot select (no MXU, no logp materialization)
        x_at_t = jnp.sum(jnp.where(row_ids[:c, :] == tg, xg, 0.0),
                         axis=0, keepdims=True)
        acc = acc + (m + lse - x_at_t)                # fused CE
        off += c

    # Mask padded / out-of-range samples of the (possibly partial) last tile,
    # then reduce over lanes in-kernel: output writeback drops from B*4 bytes
    # to 512 bytes per tile and the JAX epilogue becomes a tiny reduce.
    lane_ids = jax.lax.broadcasted_iota(jnp.int32, (1, tb), 1)
    valid = (pl.program_id(0) * tb + lane_ids) < batch
    ce = jnp.where(valid, acc, 0.0)
    tile_sum = jnp.sum(ce, axis=1, keepdims=True)     # (1, 1)
    out_ref[0] = jnp.broadcast_to(tile_sum, (1, 128))


def multi_ce_loss(logits, targets, class_labels_num):
    """JAX/Pallas equivalent of MulitCELoss.forward."""
    class_labels_num = tuple(int(c) for c in class_labels_num)
    b, csum = logits.shape
    g = len(class_labels_num)
    assert csum == sum(class_labels_num)
    assert targets.shape == (b, g)

    targets = targets.astype(jnp.int32)
    in_bytes = jnp.dtype(logits.dtype).itemsize

    # ---- generation-aware tile sizing (VMEM budget) -----------------------
    vmem_cap = 64 * 1024 * 1024               # conservative default = v7x physical
    try:
        vmem_cap = int(pltpu.get_tpu_info().vmem_capacity_bytes)
    except Exception:
        pass

    cmax = max(class_labels_num)
    # Per-sample (per-lane-of-TB) VMEM bytes.  Input blocks are lane-padded to
    # 128 and double-buffered by the BlockSpec pipeline.
    per_lane = (2 * 128 * in_bytes                         # logits blocks
                + 2 * 128 * 4                              # targets blocks
                + _round_up(csum, 8) * (in_bytes + 4)      # transposed copies
                + _round_up(cmax, 8) * 4 * 4               # per-group f32 temps
                + 64)                                      # acc / m / lse / masks
    usable = int(vmem_cap * 0.70)
    tb = max(128, (usable // per_lane) // 128 * 128)
    tb = min(tb, 64 * 1024)
    if b > 256:
        # keep at least 2 grid steps so v7x's two TensorCores both get work
        tb = min(tb, _round_up(pl.cdiv(b, 2), 128))
    if tb >= b:
        tb = _round_up(b, 8)                  # small batch: single exact tile
    num_tiles = pl.cdiv(b, tb)

    kernel = functools.partial(_multi_ce_kernel,
                               class_labels_num=class_labels_num, batch=b)
    partials = pl.pallas_call(
        kernel,
        out_shape=jax.ShapeDtypeStruct((num_tiles, 1, 128), jnp.float32),
        grid=(num_tiles,),
        in_specs=[
            pl.BlockSpec((tb, csum), lambda i: (i, 0)),   # natural [B, Csum]
            pl.BlockSpec((tb, g), lambda i: (i, 0)),      # natural [B, G]
        ],
        out_specs=pl.BlockSpec((1, 1, 128), lambda i: (i, 0, 0)),
        compiler_params=pltpu.CompilerParams(
            dimension_semantics=("parallel",),
            vmem_limit_bytes=int(min(vmem_cap * 0.85, 116 * 1024 * 1024)),
        ),
    )(logits, targets)

    # Tiny epilogue: per-tile partial sums -> mean over batch and groups.
    return jnp.sum(partials[:, 0, 0]) / (b * g)


def _reference(logits, targets, class_labels_num):
    """Pure-JAX reference mirroring the PyTorch module."""
    loss = 0.0
    off = 0
    for i, c in enumerate(class_labels_num):
        chunk = logits[:, off:off + c]
        t = targets[:, i]
        logp = jax.nn.log_softmax(chunk.astype(jnp.float32), axis=1)
        ce = -jnp.take_along_axis(logp, t[:, None], axis=1)[:, 0]
        loss = loss + jnp.mean(ce)
        off += c
    return loss / len(class_labels_num)


if __name__ == "__main__":
    key = jax.random.PRNGKey(0)
    k1, k2 = jax.random.split(key)

    class_labels_num = [3, 4, 2]          # 3 class groups, sum(Cg) = 9
    B = 8
    G = len(class_labels_num)
    Csum = sum(class_labels_num)

    logits = jax.random.normal(k1, (B, Csum), dtype=jnp.float32)
    cols = []
    kk = k2
    for c in class_labels_num:
        kk, sub = jax.random.split(kk)
        cols.append(jax.random.randint(sub, (B,), 0, c, dtype=jnp.int32))
    targets = jnp.stack(cols, axis=1)     # [B, G]

    loss = multi_ce_loss(logits, targets, class_labels_num)
    loss = jax.block_until_ready(loss)

    ref = _reference(logits, targets, class_labels_num)
    assert jnp.allclose(loss, ref, rtol=1e-5, atol=1e-5), (loss, ref)

    # TODO(synk): logits2labels / logits2probabilities helpers not ported
    # (inference-only utilities outside the forward pass).
    print("KERNEL_OK")
</pallas_src>

<mosaic_0001>
module attributes {stable_mosaic.version = 11 : i64} {
  func.func @_multi_ce_kernel(%arg0: i32, %arg1: memref<8x9xf32, #tpu.memory_space<vmem>>, %arg2: memref<8x3xi32, #tpu.memory_space<vmem>>, %arg3: memref<1x1x128xf32, #tpu.memory_space<vmem>>) attributes {dimension_semantics = [#tpu.dimension_semantics<parallel>], iteration_bounds = array<i64: 1>, scalar_prefetch = 0 : i64, scratch_operands = 0 : i64, tpu.core_type = #tpu.core_type<tc>, window_params = [{transform_indices = @transform_0, window_bounds = array<i64: 8, 9>}, {transform_indices = @transform_1, window_bounds = array<i64: 8, 3>}, {transform_indices = @transform_2, window_bounds = array<i64: 1, 1, 128>}]} {
    %c0 = arith.constant 0 : index
    %c0_0 = arith.constant 0 : index
    %0 = vector.load %arg1[%c0, %c0_0] : memref<8x9xf32, #tpu.memory_space<vmem>>, vector<8x9xf32>
    %1 = tpu.transpose %0, [1, 0] : vector<8x9xf32> -> vector<9x8xf32>
    %c0_1 = arith.constant 0 : index
    %c0_2 = arith.constant 0 : index
    %2 = vector.load %arg2[%c0_1, %c0_2] : memref<8x3xi32, #tpu.memory_space<vmem>>, vector<8x3xi32>
    %3 = tpu.transpose %2, [1, 0] : vector<8x3xi32> -> vector<3x8xi32>
    %4 = tpu.iota {dimensions = array<i32: 0>} : vector<4x8xi32>
    %cst = arith.constant 0.000000e+00 : f32
    %5 = vector.broadcast %cst : f32 to vector<1x8xf32>
    %6 = vector.extract_strided_slice %1 {offsets = [0, 0], sizes = [3, 8], strides = [1, 1]} : vector<9x8xf32> to vector<3x8xf32>
    %7 = vector.extract_strided_slice %3 {offsets = [0, 0], sizes = [1, 8], strides = [1, 1]} : vector<3x8xi32> to vector<1x8xi32>
    %cst_3 = arith.constant dense<0xFF800000> : vector<8xf32>
    %8 = vector.multi_reduction <maximumf>, %6, %cst_3 [0] : vector<3x8xf32> to vector<8xf32>
    %9 = vector.shape_cast %8 : vector<8xf32> to vector<1x8xf32>
    %10 = vector.broadcast %9 : vector<1x8xf32> to vector<3x8xf32>
    %11 = arith.subf %6, %10 : vector<3x8xf32>
    %12 = math.exp %11 : vector<3x8xf32>
    %cst_4 = arith.constant dense<0.000000e+00> : vector<8xf32>
    %13 = vector.multi_reduction <add>, %12, %cst_4 [0] : vector<3x8xf32> to vector<8xf32>
    %14 = vector.shape_cast %13 : vector<8xf32> to vector<1x8xf32>
    %15 = math.log %14 : vector<1x8xf32>
    %16 = vector.extract_strided_slice %4 {offsets = [0, 0], sizes = [3, 8], strides = [1, 1]} : vector<4x8xi32> to vector<3x8xi32>
    %17 = vector.broadcast %7 : vector<1x8xi32> to vector<3x8xi32>
    %18 = arith.cmpi eq, %16, %17 : vector<3x8xi32>
    %cst_5 = arith.constant 0.000000e+00 : f32
    %19 = vector.broadcast %cst_5 : f32 to vector<3x8xf32>
    %20 = arith.select %18, %6, %19 : vector<3x8xi1>, vector<3x8xf32>
    %cst_6 = arith.constant dense<0.000000e+00> : vector<8xf32>
    %21 = vector.multi_reduction <add>, %20, %cst_6 [0] : vector<3x8xf32> to vector<8xf32>
    %22 = vector.shape_cast %21 : vector<8xf32> to vector<1x8xf32>
    %23 = arith.addf %9, %15 : vector<1x8xf32>
    %24 = arith.subf %23, %22 : vector<1x8xf32>
    %25 = arith.addf %5, %24 : vector<1x8xf32>
    %26 = vector.extract_strided_slice %1 {offsets = [3, 0], sizes = [4, 8], strides = [1, 1]} : vector<9x8xf32> to vector<4x8xf32>
    %27 = vector.extract_strided_slice %3 {offsets = [1, 0], sizes = [1, 8], strides = [1, 1]} : vector<3x8xi32> to vector<1x8xi32>
    %cst_7 = arith.constant dense<0xFF800000> : vector<8xf32>
    %28 = vector.multi_reduction <maximumf>, %26, %cst_7 [0] : vector<4x8xf32> to vector<8xf32>
    %29 = vector.shape_cast %28 : vector<8xf32> to vector<1x8xf32>
    %30 = vector.broadcast %29 : vector<1x8xf32> to vector<4x8xf32>
    %31 = arith.subf %26, %30 : vector<4x8xf32>
    %32 = math.exp %31 : vector<4x8xf32>
    %cst_8 = arith.constant dense<0.000000e+00> : vector<8xf32>
    %33 = vector.multi_reduction <add>, %32, %cst_8 [0] : vector<4x8xf32> to vector<8xf32>
    %34 = vector.shape_cast %33 : vector<8xf32> to vector<1x8xf32>
    %35 = math.log %34 : vector<1x8xf32>
    %36 = vector.broadcast %27 : vector<1x8xi32> to vector<4x8xi32>
    %37 = arith.cmpi eq, %4, %36 : vector<4x8xi32>
    %cst_9 = arith.constant 0.000000e+00 : f32
    %38 = vector.broadcast %cst_9 : f32 to vector<4x8xf32>
    %39 = arith.select %37, %26, %38 : vector<4x8xi1>, vector<4x8xf32>
    %cst_10 = arith.constant dense<0.000000e+00> : vector<8xf32>
    %40 = vector.multi_reduction <add>, %39, %cst_10 [0] : vector<4x8xf32> to vector<8xf32>
    %41 = vector.shape_cast %40 : vector<8xf32> to vector<1x8xf32>
    %42 = arith.addf %29, %35 : vector<1x8xf32>
    %43 = arith.subf %42, %41 : vector<1x8xf32>
    %44 = arith.addf %25, %43 : vector<1x8xf32>
    %45 = vector.extract_strided_slice %1 {offsets = [7, 0], sizes = [2, 8], strides = [1, 1]} : vector<9x8xf32> to vector<2x8xf32>
    %46 = vector.extract_strided_slice %3 {offsets = [2, 0], sizes = [1, 8], strides = [1, 1]} : vector<3x8xi32> to vector<1x8xi32>
    %cst_11 = arith.constant dense<0xFF800000> : vector<8xf32>
    %47 = vector.multi_reduction <maximumf>, %45, %cst_11 [0] : vector<2x8xf32> to vector<8xf32>
    %48 = vector.shape_cast %47 : vector<8xf32> to vector<1x8xf32>
    %49 = vector.broadcast %48 : vector<1x8xf32> to vector<2x8xf32>
    %50 = arith.subf %45, %49 : vector<2x8xf32>
    %51 = math.exp %50 : vector<2x8xf32>
    %cst_12 = arith.constant dense<0.000000e+00> : vector<8xf32>
    %52 = vector.multi_reduction <add>, %51, %cst_12 [0] : vector<2x8xf32> to vector<8xf32>
    %53 = vector.shape_cast %52 : vector<8xf32> to vector<1x8xf32>
    %54 = math.log %53 : vector<1x8xf32>
    %55 = vector.extract_strided_slice %4 {offsets = [0, 0], sizes = [2, 8], strides = [1, 1]} : vector<4x8xi32> to vector<2x8xi32>
    %56 = vector.broadcast %46 : vector<1x8xi32> to vector<2x8xi32>
    %57 = arith.cmpi eq, %55, %56 : vector<2x8xi32>
    %cst_13 = arith.constant 0.000000e+00 : f32
    %58 = vector.broadcast %cst_13 : f32 to vector<2x8xf32>
    %59 = arith.select %57, %45, %58 : vector<2x8xi1>, vector<2x8xf32>
    %cst_14 = arith.constant dense<0.000000e+00> : vector<8xf32>
    %60 = vector.multi_reduction <add>, %59, %cst_14 [0] : vector<2x8xf32> to vector<8xf32>
    %61 = vector.shape_cast %60 : vector<8xf32> to vector<1x8xf32>
    %62 = arith.addf %48, %54 : vector<1x8xf32>
    %63 = arith.subf %62, %61 : vector<1x8xf32>
    %64 = arith.addf %44, %63 : vector<1x8xf32>
    %65 = tpu.iota {dimensions = array<i32: 1>} : vector<1x8xi32>
    %c8_i32 = arith.constant 8 : i32
    %66 = arith.muli %arg0, %c8_i32 : i32
    %67 = vector.broadcast %66 : i32 to vector<1x8xi32>
    %68 = arith.addi %67, %65 : vector<1x8xi32>
    %c8_i32_15 = arith.constant 8 : i32
    %69 = vector.broadcast %c8_i32_15 : i32 to vector<1x8xi32>
    %70 = arith.cmpi slt, %68, %69 : vector<1x8xi32>
    %cst_16 = arith.constant 0.000000e+00 : f32
    %71 = vector.broadcast %cst_16 : f32 to vector<1x8xf32>
    %72 = arith.select %70, %64, %71 : vector<1x8xi1>, vector<1x8xf32>
    %cst_17 = arith.constant dense<0.000000e+00> : vector<1xf32>
    %73 = vector.multi_reduction <add>, %72, %cst_17 [1] : vector<1x8xf32> to vector<1xf32>
    %74 = vector.shape_cast %73 : vector<1xf32> to vector<1x1xf32>
    %75 = vector.shape_cast %74 : vector<1x1xf32> to vector<1x1xf32>
    %76 = vector.broadcast %75 : vector<1x1xf32> to vector<1x128xf32>
    %c0_18 = arith.constant 0 : index
    %c0_19 = arith.constant 0 : index
    %c0_20 = arith.constant 0 : index
    %77 = vector.load %arg3[%c0_18, %c0_19, %c0_20] : memref<1x1x128xf32, #tpu.memory_space<vmem>>, vector<1x1x128xf32>
    %78 = vector.shape_cast %77 : vector<1x1x128xf32> to vector<1x128xf32>
    %79 = vector.shape_cast %76 : vector<1x128xf32> to vector<1x1x128xf32>
    tpu.vector_store %arg3[%c0_18, %c0_19, %c0_20], %79 {strides = array<i32>} : memref<1x1x128xf32, #tpu.memory_space<vmem>>, vector<1x1x128xf32>,
    return
  }
  func.func @transform_0(%arg0: i32) -> (i32, i32) {
    %c0_i32 = arith.constant 0 : i32
    %c0_i32_0 = arith.constant 0 : i32
    return %arg0, %c0_i32 : i32, i32
  }
  func.func @transform_1(%arg0: i32) -> (i32, i32) {
    %c0_i32 = arith.constant 0 : i32
    %c0_i32_0 = arith.constant 0 : i32
    return %arg0, %c0_i32 : i32, i32
  }
  func.func @transform_2(%arg0: i32) -> (i32, i32, i32) {
    %c0_i32 = arith.constant 0 : i32
    %c0_i32_0 = arith.constant 0 : i32
    %c0_i32_1 = arith.constant 0 : i32
    return %arg0, %c0_i32, %c0_i32_0 : i32, i32, i32
  }
}

</mosaic_0001>

<llo_original>
// kernel: tpu_custom_call.1
$region0: #{tpu_custom_call.1}
  #allocation0 [shape = 'u32[]', space=smem, size = 0x4, offset = 0x4, fixed_abs, tag = 'smem constant byte address 0x4 - core index']
  #allocation1 [shape = 'u32[72,128]{1,0:T(1,128)}', space=vmem, size = 0x9000, scoped, tag = 'internal scratch']
  %s0 = inlined_call_operand.vmem [shape: f32[8,9], index: 0, kind: input, shape index: {}]
  %s1 = inlined_call_operand.vmem [shape: s32[8,3], index: 1, kind: input, shape index: {}]
  %s2 = inlined_call_operand.hbm [shape: f32[1,1,128], index: 2, kind: output, shape index: {}]
  %s3 = sld [smem:[#allocation0]]
  $region18: #{tpu_custom_call.1} parent=0
    _
  %s5 = ssub.s32 1, %s3
  %s6 = scalar_select 0, %s5, %s3
  $region1: #{tpu_custom_call.1} parent=0
    #allocation2 [shape = 'u8[512]{0}', space=vmem, size = 0x400, scoped, tag = 'output window, operand 0, single buffered']
    #allocation3 [shape = 's32[1]{0}', space=sflag, size = 0x4, scoped, tag = 'scoped memory for tpu_custom_call.1']
    %7 = vsyncpa [#allocation3], 0
    // Predicated region
    $region2: #{tpu_custom_call.1} parent=1 // pred_check
      _
    $region3: #{tpu_custom_call.1} parent=1 // pred_check_branch
      %9 = sbr.rel (0) target = $region5
    $region4: #{tpu_custom_call.1} parent=1 // pred_region
      _
    $region5: #{tpu_custom_call.1} parent=1 // pred_fallthru
      _
    // Predicated region
    $region6: #{tpu_custom_call.1} parent=1 // pred_check
      _
    $region7: #{tpu_custom_call.1} parent=1 // pred_check_branch
      %11 = sbr.rel (0) target = $region9
    $region8: #{tpu_custom_call.1} parent=1 // pred_region
      _
    $region9: #{tpu_custom_call.1} parent=1 // pred_fallthru
      _
    %v12 = vld [vmem:[%s0] sm:$0xff]
    %13 = vxpose.xlu0.b32.start [1/16] %v12, 128
    %14 = vxpose.xlu0.b32.cont [2/16] 0.0, 128
    %15 = vxpose.xlu0.b32.cont [3/16] 0.0, 128
    %16 = vxpose.xlu0.b32.cont [4/16] 0.0, 128
    %17 = vxpose.xlu0.b32.cont [5/16] 0.0, 128
    %18 = vxpose.xlu0.b32.cont [6/16] 0.0, 128
    %19 = vxpose.xlu0.b32.cont [7/16] 0.0, 128
    %20 = vxpose.xlu0.b32.cont [8/16] 0.0, 128
    %21 = vxpose.xlu0.b32.cont [9/16] 0.0, 128
    %22 = vxpose.xlu0.b32.cont [10/16] 0.0, 128
    %23 = vxpose.xlu0.b32.cont [11/16] 0.0, 128
    %24 = vxpose.xlu0.b32.cont [12/16] 0.0, 128
    %25 = vxpose.xlu0.b32.cont [13/16] 0.0, 128
    %26 = vxpose.xlu0.b32.cont [14/16] 0.0, 128
    %27 = vxpose.xlu0.b32.cont [15/16] 0.0, 128
    %28 = vxpose.xlu0.b32.end [16/16] 0.0, 128
    %v29 = vpop.trf.xlu0
    %v30 = vpop.trf.xlu0
    %v31 = vpop.trf.xlu0
    %v32 = vpop.trf.xlu0
    %v33 = vpop.trf.xlu0
    %v34 = vpop.trf.xlu0
    %v35 = vpop.trf.xlu0
    %v36 = vpop.trf.xlu0
    %v37 = vpop.trf.xlu0
    %v38 = vpop.trf.xlu0
    %v39 = vpop.trf.xlu0
    %v40 = vpop.trf.xlu0
    %v41 = vpop.trf.xlu0
    %v42 = vpop.trf.xlu0
    %v43 = vpop.trf.xlu0
    %v44 = vpop.trf.xlu0
    %v45 = vld [vmem:[%s1] sm:$0xff]
    %46 = vxpose.xlu0.b32.start [1/16] %v45, 128
    %47 = vxpose.xlu0.b32.cont [2/16] 0, 128
    %48 = vxpose.xlu0.b32.cont [3/16] 0, 128
    %49 = vxpose.xlu0.b32.cont [4/16] 0, 128
    %50 = vxpose.xlu0.b32.cont [5/16] 0, 128
    %51 = vxpose.xlu0.b32.cont [6/16] 0, 128
    %52 = vxpose.xlu0.b32.cont [7/16] 0, 128
    %53 = vxpose.xlu0.b32.cont [8/16] 0, 128
    %54 = vxpose.xlu0.b32.cont [9/16] 0, 128
    %55 = vxpose.xlu0.b32.cont [10/16] 0, 128
    %56 = vxpose.xlu0.b32.cont [11/16] 0, 128
    %57 = vxpose.xlu0.b32.cont [12/16] 0, 128
    %58 = vxpose.xlu0.b32.cont [13/16] 0, 128
    %59 = vxpose.xlu0.b32.cont [14/16] 0, 128
    %60 = vxpose.xlu0.b32.cont [15/16] 0, 128
    %61 = vxpose.xlu0.b32.end [16/16] 0, 128
    %v62 = vpop.trf.xlu0
    %v63 = vpop.trf.xlu0
    %v64 = vpop.trf.xlu0
    %v65 = vpop.trf.xlu0
    %v66 = vpop.trf.xlu0
    %v67 = vpop.trf.xlu0
    %v68 = vpop.trf.xlu0
    %v69 = vpop.trf.xlu0
    %v70 = vpop.trf.xlu0
    %v71 = vpop.trf.xlu0
    %v72 = vpop.trf.xlu0
    %v73 = vpop.trf.xlu0
    %v74 = vpop.trf.xlu0
    %v75 = vpop.trf.xlu0
    %v76 = vpop.trf.xlu0
    %v77 = vpop.trf.xlu0
    %v78 = vlaneseq
    %v79 = vshrl.u32 %v78, 7
    %vm80 = vcmask 59392
    %v81 = vsel %vm80, %v29, -inf
    %v82 = vrot.slane %v81, 4
    %v83 = vmax.f32 %v81, %v82
    %v84 = vrot.slane %v83, 2
    %v85 = vmax.f32 %v83, %v84
    %v86 = vrot.slane %v85, 1
    %v87 = vmax.f32 %v85, %v86
    %v88 = vsub.f32 %v29, %v87
    %v89 = vmul.f32 %v88, 1.442695
    %v90 = vpow.pop %v89
    %v91 = vsel %vm80, %v90, 0.0
    %v92 = vrot.slane %v91, 4
    %v93 = vadd.f32 %v91, %v92
    %v94 = vrot.slane %v93, 2
    %v95 = vadd.f32 %v93, %v94
    %v96 = vrot.slane %v95, 1
    %v97 = vadd.f32 %v95, %v96
    %v98 = vlog2.pop %v97
    %v99 = vmul.f32 %v98, 0.6931472
    %v100 = vperm.slane %v62, 0
    %vm101 = vcmp.eq.s32.totalorder %v79, %v100
    %v102 = vsel %vm101, %v29, 0.0
    %v103 = vsel %vm80, %v102, 0.0
    %v104 = vrot.slane %v103, 4
    %v105 = vadd.f32 %v103, %v104
    %v106 = vrot.slane %v105, 2
    %v107 = vadd.f32 %v105, %v106
    %v108 = vrot.slane %v107, 1
    %v109 = vadd.f32 %v107, %v108
    %v110 = vadd.f32 %v87, %v99
    %v111 = vsub.f32 %v110, %v109
    %v112 = vadd.f32 %v111, 0.0
    %vm113 = vcmask 63491
    %v114 = vsel %vm113, %v29, -inf
    %v115 = vrot.slane %v114, 4
    %v116 = vmax.f32 %v114, %v115
    %v117 = vrot.slane %v116, 2
    %v118 = vmax.f32 %v116, %v117
    %v119 = vrot.slane %v118, 1
    %v120 = vmax.f32 %v118, %v119
    %v121 = vsub.f32 %v29, %v120
    %v122 = vmul.f32 %v121, 1.442695
    %v123 = vpow.pop %v122
    %v125 = vrot.slane %v123, 3
    %vm127 = vcmask 60416
    %v128 = vsel %vm127, %v125, 0.0
    %v129 = vrot.slane %v128, 4
    %v130 = vadd.f32 %v128, %v129
    %v131 = vrot.slane %v130, 2
    %v132 = vadd.f32 %v130, %v131
    %v133 = vrot.slane %v132, 1
    %v134 = vadd.f32 %v132, %v133
    %v135 = vlog2.pop %v134
    %v136 = vmul.f32 %v135, 0.6931472
    %v137 = vperm.slane %v62, 1
    %vm138 = vcmp.eq.s32.totalorder %v79, %v137
    %v140 = vrot.slane %v29, 3
    %v142 = vsel %vm138, %v140, 0.0
    %v143 = vsel %vm127, %v142, 0.0
    %v144 = vrot.slane %v143, 4
    %v145 = vadd.f32 %v143, %v144
    %v146 = vrot.slane %v145, 2
    %v147 = vadd.f32 %v145, %v146
    %v148 = vrot.slane %v147, 1
    %v149 = vadd.f32 %v147, %v148
    %v150 = vadd.f32 %v120, %v136
    %v151 = vsub.f32 %v150, %v149
    %v152 = vadd.f32 %v112, %v151
    %vm153 = vcmask 64519
    %v154 = vsel %vm153, %v29, -inf
    %vm155 = vcmask 57344
    %v156 = vsel %vm155, %v30, -inf
    %v157 = vmax.f32 %v154, %v156
    %v158 = vrot.slane %v157, 4
    %v159 = vmax.f32 %v157, %v158
    %v160 = vrot.slane %v159, 2
    %v161 = vmax.f32 %v159, %v160
    %v162 = vrot.slane %v161, 1
    %v163 = vmax.f32 %v161, %v162
    %v164 = vsub.f32 %v29, %v163
    %v165 = vsub.f32 %v30, %v163
    %v166 = vmul.f32 %v164, 1.442695
    %v167 = vpow.pop %v166
    %v168 = vmul.f32 %v165, 1.442695
    %v169 = vpow.pop %v168
    %vm172 = vcmask 1040384
    %v173 = vrot.slane %v167, 7
    %v174 = vrot.slane %v169, 7
    %v175 = vsel %vm172, %v173, %v174
    %vm177 = vcmask 58368
    %v178 = vsel %vm177, %v175, 0.0
    %v179 = vrot.slane %v178, 4
    %v180 = vadd.f32 %v178, %v179
    %v181 = vrot.slane %v180, 2
    %v182 = vadd.f32 %v180, %v181
    %v183 = vrot.slane %v182, 1
    %v184 = vadd.f32 %v182, %v183
    %v185 = vlog2.pop %v184
    %v186 = vmul.f32 %v185, 0.6931472
    %v187 = vperm.slane %v62, 2
    %vm188 = vcmp.eq.s32.totalorder %v79, %v187
    %v190 = vrot.slane %v29, 7
    %v191 = vrot.slane %v30, 7
    %v192 = vsel %vm172, %v190, %v191
    %v194 = vsel %vm188, %v192, 0.0
    %v195 = vsel %vm177, %v194, 0.0
    %v196 = vrot.slane %v195, 4
    %v197 = vadd.f32 %v195, %v196
    %v198 = vrot.slane %v197, 2
    %v199 = vadd.f32 %v197, %v198
    %v200 = vrot.slane %v199, 1
    %v201 = vadd.f32 %v199, %v200
    %v202 = vadd.f32 %v163, %v186
    %v203 = vsub.f32 %v202, %v201
    %v204 = vadd.f32 %v152, %v203
    %v205 = vlaneseq
    %v206 = vand.u32 %v205, 127
    %s207 = smul.u32 0, 8
    %v208 = vstv %s207
    %v209 = vadd.s32 %v208, %v206
    %vm210 = vcmp.lt.s32.totalorder %v209, 8
    %v211 = vsel %vm210, %v204, 0.0
    %vm212 = vcmask 64512
    %v213 = vsel %vm212, %v211, 0.0
    %214 = vadd.xlane.f32.xlu0 %v213
    %v215 = vpop.xlane.xlu0 %214
    %216 = vst [vmem:[#allocation2] sm:$0x1] %v215
    // Predicated region
    $region10: #{tpu_custom_call.1} parent=1 // pred_check
      _
    $region11: #{tpu_custom_call.1} parent=1 // pred_check_branch
      %218 = sbr.rel (0) target = $region13
    $region12: #{tpu_custom_call.1} parent=1 // pred_region
      %220 = vsyncadd [#allocation3], 0
      %s222 = sshll.u32 [#allocation2], 4
      %s223 = int_to_ptr.vmem [resolvable:$true] %s222
      %s224 = sshll.u32 %s2, 4
      %s225 = int_to_ptr.hbm [resolvable:$true] %s224
      %227 = dma.vmem_to_hbm [thread:$0]  %s223, 16, %s225, [#allocation3]
    $region13: #{tpu_custom_call.1} parent=1 // pred_fallthru
      _
    // Predicated region
    $region14: #{tpu_custom_call.1} parent=1 // pred_check
      _
    $region15: #{tpu_custom_call.1} parent=1 // pred_check_branch
      %229 = sbr.rel (0) target = $region17
    $region16: #{tpu_custom_call.1} parent=1 // pred_region
      %231 = dma.done [#allocation3], 16
    $region17: #{tpu_custom_call.1} parent=1 // pred_fallthru
      _
    %232 = vsyncpa [#allocation3], 1

</llo_original>
